<compile_context>
chip_gen: v7x
topology: tpu7x:2x2x1
jax: 0.10.0
libtpu: 0.0.40
codegen_flags: <defaults>
</compile_context>

<pallas_src>
import jax
import jax.numpy as jnp
from jax.experimental import pallas as pl
from jax.experimental.pallas import tpu as pltpu


def _round_up(x, m):
    return ((x + m - 1) // m) * m


def _make_blackout2_kernel(k, eps, total_cols, tile_cols):
    kf = float(k)
    needs_mask = (total_cols % tile_cols) != 0

    def kernel(ind_ref, yhatT_ref, y_ref, out_ref):
        logits = yhatT_ref[...].astype(jnp.float32)          # (C, TC) f32
        labels = y_ref[...]                                   # (1, TC) int32
        C, TC = logits.shape

        # Numerically-stable per-sample max (sublane reduce over C classes).
        col_max = jnp.max(logits, axis=0, keepdims=True)      # (1, TC)
        exp_sh = jnp.exp(logits - col_max)                     # (C, TC)

        # Class-id iota on the sublane axis, reused by every gather below.
        class_ids = jax.lax.broadcasted_iota(jnp.int32, (C, TC), 0)

        # True-class term: one-hot select + sublane sum (exactly one hit).
        yg_e = kf * jnp.sum(jnp.where(class_ids == labels, exp_sh, 0.0),
                            axis=0, keepdims=True)             # (1, TC)

        # k sampled classes: indices are SMEM scalars; compare/select gather
        # (pure VPU), zeroed where the sample collides with the true label.
        denom = yg_e
        comps = []
        for s in range(k):                                     # static unroll
            idx = ind_ref[s]
            gathered = jnp.sum(jnp.where(class_ids == idx, exp_sh, 0.0),
                               axis=0, keepdims=True)           # (1, TC)
            comp_s = jnp.where(labels == idx, 0.0, kf * gathered)
            comps.append(comp_s)
            denom = denom + comp_s

        inv = 1.0 / denom                                      # one divide / 128 samples
        per_row = jnp.log(yg_e * inv + eps)                    # slot-0 term
        for comp_s in comps:
            per_row = per_row + jnp.log((1.0 - comp_s * inv) + eps)

        if needs_mask:
            # Only the last tile can run past the batch; jnp.where (not a
            # multiply) so NaN/Inf from OOB garbage never reaches the sum.
            col_ids = (pl.program_id(0) * tile_cols
                       + jax.lax.broadcasted_iota(jnp.int32, (1, TC), 1))
            per_row = jnp.where(col_ids < total_cols, per_row, 0.0)

        partial = jnp.sum(per_row)                             # tile scalar

        # Deposit the tile's partial sum at [0,0] of this tile's own (8,128)
        # output block (lane/sublane-aligned block -> plain unmasked store;
        # per-tile blocks keep the grid race-free under "parallel").
        r = jax.lax.broadcasted_iota(jnp.int32, (8, 128), 0)
        c = jax.lax.broadcasted_iota(jnp.int32, (8, 128), 1)
        out_ref[...] = jnp.where((r == 0) & (c == 0), partial, 0.0)

    return kernel


def _choose_tile_cols(batch, num_classes, itemsize):
    # Budget against 128-lane-dense, sublane-padded, double-buffered VMEM:
    #   logits tile ~ round_up(C,8)*itemsize bytes/sample,
    #   labels tile ~ 8*4 bytes/sample (a (1,TC) int32 row pads to 8 sublanes).
    per_col = _round_up(num_classes, 8) * itemsize + 8 * 4
    budget = 12 * 1024 * 1024            # buffered input bytes target
    tc = budget // (2 * per_col)
    tc = max(128, min(32768, (tc // 128) * 128))   # v7x-safe cap
    if batch <= tc:
        return batch                     # single tile: block dim == full dim
    return tc


def blackout2_loss(yhat, y, ind, *, eps=1e-10, tile_cols=None):
    """Pallas forward pass of blackout2.

    yhat: (B, C) logits (native dtype; upcast to f32 inside the kernel)
    y   : (B,)   int labels
    ind : (k,)   sampled class indices (the torch.randint draw, made explicit)
    tile_cols, if given, must be a multiple of 128 (or >= B).
    """
    B, C = yhat.shape
    k = int(ind.shape[0])

    # Lane-dense layout: classes on sublanes, samples on lanes.
    yhatT = jnp.transpose(yhat)                       # (C, B), native dtype
    y2d = y.astype(jnp.int32).reshape(1, B)           # (1, B)
    ind_i32 = ind.astype(jnp.int32).reshape(k)        # scalar-prefetch -> SMEM

    if tile_cols is None:
        tile_cols = _choose_tile_cols(B, C, jnp.dtype(yhat.dtype).itemsize)
    tile_cols = int(min(tile_cols, B)) if B <= tile_cols else int(tile_cols)
    n = pl.cdiv(B, tile_cols)

    kernel = _make_blackout2_kernel(k, float(eps), int(B), int(tile_cols))

    partials = pl.pallas_call(
        kernel,
        out_shape=jax.ShapeDtypeStruct((8 * n, 128), jnp.float32),
        grid_spec=pltpu.PrefetchScalarGridSpec(
            num_scalar_prefetch=1,
            grid=(n,),
            in_specs=[
                pl.BlockSpec((C, tile_cols), lambda i, ind: (0, i)),
                pl.BlockSpec((1, tile_cols), lambda i, ind: (0, i)),
            ],
            out_specs=pl.BlockSpec((8, 128), lambda i, ind: (i, 0)),
        ),
        compiler_params=pltpu.CompilerParams(
            dimension_semantics=("parallel",),
            vmem_limit_bytes=32 * 1024 * 1024,
        ),
    )(ind_i32, yhatT, y2d)

    count = float(B * (k + 1))
    return -(jnp.sum(partials) / count)


def _reference_blackout2(yhat, y, ind, *, eps=1e-10):
    """Pure-JAX mirror of the PyTorch forward (same `ind`), for self-check."""
    B, C = yhat.shape
    k = int(ind.shape[0])
    yh = yhat.astype(jnp.float32)
    yh = yh - jnp.max(yh, axis=-1, keepdims=True)
    Yg = jnp.take_along_axis(yh, y.reshape(B, 1).astype(jnp.int32), axis=1)
    complement = jnp.take(yh, ind, axis=1)                       # yHat[:, ind]
    m = (y.reshape(B, 1) != ind.reshape(1, k)).astype(jnp.float32)
    complement = k * jnp.exp(complement) * m
    Yg = k * jnp.exp(Yg)
    out = jnp.concatenate([Yg, complement], axis=1)
    out = out / jnp.sum(out, axis=1, keepdims=True)
    out_c = 1.0 - out
    mask = jnp.zeros((B, k + 1), jnp.float32).at[:, 0].set(1.0)
    mask_c = 1.0 - mask
    loss = -1.0 * jnp.mean(jnp.log(out + eps) * mask
                           + jnp.log(out_c + eps) * mask_c)
    return loss


if __name__ == "__main__":
    classes = 10
    k = 5
    batch = 8
    eps = 1e-10

    key = jax.random.PRNGKey(0)
    k1, k2, k3 = jax.random.split(key, 3)
    yhat = jax.random.normal(k1, (batch, classes), dtype=jnp.float32)
    y = jax.random.randint(k2, (batch,), 0, classes, dtype=jnp.int32)
    # The module's torch.randint draw, made an explicit deterministic input.
    ind = jax.random.randint(k3, (k,), 0, classes, dtype=jnp.int32)

    loss = jax.block_until_ready(blackout2_loss(yhat, y, ind, eps=eps))
    ref = jax.block_until_ready(_reference_blackout2(yhat, y, ind, eps=eps))
    assert jnp.allclose(loss, ref, rtol=1e-5, atol=1e-6), (loss, ref)

    # Also exercise the multi-tile grid + padded-last-tile + parallel path.
    batch2 = 300
    k4, k5 = jax.random.split(k1)
    yhat2 = jax.random.normal(k4, (batch2, classes), dtype=jnp.float32)
    y2 = jax.random.randint(k5, (batch2,), 0, classes, dtype=jnp.int32)
    loss2 = jax.block_until_ready(
        blackout2_loss(yhat2, y2, ind, eps=eps, tile_cols=128))
    ref2 = jax.block_until_ready(_reference_blackout2(yhat2, y2, ind, eps=eps))
    assert jnp.allclose(loss2, ref2, rtol=1e-5, atol=1e-6), (loss2, ref2)

    print("KERNEL_OK")
</pallas_src>

<mosaic_0001>
module attributes {stable_mosaic.version = 11 : i64} {
  func.func @kernel(%arg0: i32, %arg1: memref<5xi32, #tpu.memory_space<smem>>, %arg2: memref<10x8xf32, #tpu.memory_space<vmem>>, %arg3: memref<1x8xi32, #tpu.memory_space<vmem>>, %arg4: memref<8x128xf32, #tpu.memory_space<vmem>>) attributes {dimension_semantics = [#tpu.dimension_semantics<parallel>], iteration_bounds = array<i64: 1>, scalar_prefetch = 1 : i64, scratch_operands = 0 : i64, tpu.core_type = #tpu.core_type<tc>, window_params = [{transform_indices = @transform_0, window_bounds = array<i64: 10, 8>}, {transform_indices = @transform_1, window_bounds = array<i64: 1, 8>}, {transform_indices = @transform_2, window_bounds = array<i64: 8, 128>}]} {
    %c0 = arith.constant 0 : index
    %c0_0 = arith.constant 0 : index
    %0 = vector.load %arg2[%c0, %c0_0] : memref<10x8xf32, #tpu.memory_space<vmem>>, vector<10x8xf32>
    %c0_1 = arith.constant 0 : index
    %c0_2 = arith.constant 0 : index
    %1 = vector.load %arg3[%c0_1, %c0_2] : memref<1x8xi32, #tpu.memory_space<vmem>>, vector<1x8xi32>
    %cst = arith.constant dense<0xFF800000> : vector<8xf32>
    %2 = vector.multi_reduction <maximumf>, %0, %cst [0] : vector<10x8xf32> to vector<8xf32>
    %3 = vector.shape_cast %2 : vector<8xf32> to vector<1x8xf32>
    %4 = vector.broadcast %3 : vector<1x8xf32> to vector<10x8xf32>
    %5 = arith.subf %0, %4 : vector<10x8xf32>
    %6 = math.exp %5 : vector<10x8xf32>
    %7 = tpu.iota {dimensions = array<i32: 0>} : vector<10x8xi32>
    %8 = vector.broadcast %1 : vector<1x8xi32> to vector<10x8xi32>
    %9 = arith.cmpi eq, %7, %8 : vector<10x8xi32>
    %cst_3 = arith.constant 0.000000e+00 : f32
    %10 = vector.broadcast %cst_3 : f32 to vector<10x8xf32>
    %11 = arith.select %9, %6, %10 : vector<10x8xi1>, vector<10x8xf32>
    %cst_4 = arith.constant dense<0.000000e+00> : vector<8xf32>
    %12 = vector.multi_reduction <add>, %11, %cst_4 [0] : vector<10x8xf32> to vector<8xf32>
    %13 = vector.shape_cast %12 : vector<8xf32> to vector<1x8xf32>
    %cst_5 = arith.constant 5.000000e+00 : f32
    %14 = vector.broadcast %cst_5 : f32 to vector<1x8xf32>
    %15 = arith.mulf %14, %13 : vector<1x8xf32>
    %c0_6 = arith.constant 0 : index
    %16 = memref.load %arg1[%c0_6] : memref<5xi32, #tpu.memory_space<smem>>
    %17 = vector.broadcast %16 : i32 to vector<10x8xi32>
    %18 = arith.cmpi eq, %7, %17 : vector<10x8xi32>
    %cst_7 = arith.constant 0.000000e+00 : f32
    %19 = vector.broadcast %cst_7 : f32 to vector<10x8xf32>
    %20 = arith.select %18, %6, %19 : vector<10x8xi1>, vector<10x8xf32>
    %cst_8 = arith.constant dense<0.000000e+00> : vector<8xf32>
    %21 = vector.multi_reduction <add>, %20, %cst_8 [0] : vector<10x8xf32> to vector<8xf32>
    %22 = vector.shape_cast %21 : vector<8xf32> to vector<1x8xf32>
    %23 = vector.broadcast %16 : i32 to vector<1x8xi32>
    %24 = arith.cmpi eq, %1, %23 : vector<1x8xi32>
    %cst_9 = arith.constant 5.000000e+00 : f32
    %25 = vector.broadcast %cst_9 : f32 to vector<1x8xf32>
    %26 = arith.mulf %25, %22 : vector<1x8xf32>
    %cst_10 = arith.constant 0.000000e+00 : f32
    %27 = vector.broadcast %cst_10 : f32 to vector<1x8xf32>
    %28 = arith.select %24, %27, %26 : vector<1x8xi1>, vector<1x8xf32>
    %29 = arith.addf %15, %28 : vector<1x8xf32>
    %c1 = arith.constant 1 : index
    %30 = memref.load %arg1[%c1] : memref<5xi32, #tpu.memory_space<smem>>
    %31 = vector.broadcast %30 : i32 to vector<10x8xi32>
    %32 = arith.cmpi eq, %7, %31 : vector<10x8xi32>
    %cst_11 = arith.constant 0.000000e+00 : f32
    %33 = vector.broadcast %cst_11 : f32 to vector<10x8xf32>
    %34 = arith.select %32, %6, %33 : vector<10x8xi1>, vector<10x8xf32>
    %cst_12 = arith.constant dense<0.000000e+00> : vector<8xf32>
    %35 = vector.multi_reduction <add>, %34, %cst_12 [0] : vector<10x8xf32> to vector<8xf32>
    %36 = vector.shape_cast %35 : vector<8xf32> to vector<1x8xf32>
    %37 = vector.broadcast %30 : i32 to vector<1x8xi32>
    %38 = arith.cmpi eq, %1, %37 : vector<1x8xi32>
    %cst_13 = arith.constant 5.000000e+00 : f32
    %39 = vector.broadcast %cst_13 : f32 to vector<1x8xf32>
    %40 = arith.mulf %39, %36 : vector<1x8xf32>
    %cst_14 = arith.constant 0.000000e+00 : f32
    %41 = vector.broadcast %cst_14 : f32 to vector<1x8xf32>
    %42 = arith.select %38, %41, %40 : vector<1x8xi1>, vector<1x8xf32>
    %43 = arith.addf %29, %42 : vector<1x8xf32>
    %c2 = arith.constant 2 : index
    %44 = memref.load %arg1[%c2] : memref<5xi32, #tpu.memory_space<smem>>
    %45 = vector.broadcast %44 : i32 to vector<10x8xi32>
    %46 = arith.cmpi eq, %7, %45 : vector<10x8xi32>
    %cst_15 = arith.constant 0.000000e+00 : f32
    %47 = vector.broadcast %cst_15 : f32 to vector<10x8xf32>
    %48 = arith.select %46, %6, %47 : vector<10x8xi1>, vector<10x8xf32>
    %cst_16 = arith.constant dense<0.000000e+00> : vector<8xf32>
    %49 = vector.multi_reduction <add>, %48, %cst_16 [0] : vector<10x8xf32> to vector<8xf32>
    %50 = vector.shape_cast %49 : vector<8xf32> to vector<1x8xf32>
    %51 = vector.broadcast %44 : i32 to vector<1x8xi32>
    %52 = arith.cmpi eq, %1, %51 : vector<1x8xi32>
    %cst_17 = arith.constant 5.000000e+00 : f32
    %53 = vector.broadcast %cst_17 : f32 to vector<1x8xf32>
    %54 = arith.mulf %53, %50 : vector<1x8xf32>
    %cst_18 = arith.constant 0.000000e+00 : f32
    %55 = vector.broadcast %cst_18 : f32 to vector<1x8xf32>
    %56 = arith.select %52, %55, %54 : vector<1x8xi1>, vector<1x8xf32>
    %57 = arith.addf %43, %56 : vector<1x8xf32>
    %c3 = arith.constant 3 : index
    %58 = memref.load %arg1[%c3] : memref<5xi32, #tpu.memory_space<smem>>
    %59 = vector.broadcast %58 : i32 to vector<10x8xi32>
    %60 = arith.cmpi eq, %7, %59 : vector<10x8xi32>
    %cst_19 = arith.constant 0.000000e+00 : f32
    %61 = vector.broadcast %cst_19 : f32 to vector<10x8xf32>
    %62 = arith.select %60, %6, %61 : vector<10x8xi1>, vector<10x8xf32>
    %cst_20 = arith.constant dense<0.000000e+00> : vector<8xf32>
    %63 = vector.multi_reduction <add>, %62, %cst_20 [0] : vector<10x8xf32> to vector<8xf32>
    %64 = vector.shape_cast %63 : vector<8xf32> to vector<1x8xf32>
    %65 = vector.broadcast %58 : i32 to vector<1x8xi32>
    %66 = arith.cmpi eq, %1, %65 : vector<1x8xi32>
    %cst_21 = arith.constant 5.000000e+00 : f32
    %67 = vector.broadcast %cst_21 : f32 to vector<1x8xf32>
    %68 = arith.mulf %67, %64 : vector<1x8xf32>
    %cst_22 = arith.constant 0.000000e+00 : f32
    %69 = vector.broadcast %cst_22 : f32 to vector<1x8xf32>
    %70 = arith.select %66, %69, %68 : vector<1x8xi1>, vector<1x8xf32>
    %71 = arith.addf %57, %70 : vector<1x8xf32>
    %c4 = arith.constant 4 : index
    %72 = memref.load %arg1[%c4] : memref<5xi32, #tpu.memory_space<smem>>
    %73 = vector.broadcast %72 : i32 to vector<10x8xi32>
    %74 = arith.cmpi eq, %7, %73 : vector<10x8xi32>
    %cst_23 = arith.constant 0.000000e+00 : f32
    %75 = vector.broadcast %cst_23 : f32 to vector<10x8xf32>
    %76 = arith.select %74, %6, %75 : vector<10x8xi1>, vector<10x8xf32>
    %cst_24 = arith.constant dense<0.000000e+00> : vector<8xf32>
    %77 = vector.multi_reduction <add>, %76, %cst_24 [0] : vector<10x8xf32> to vector<8xf32>
    %78 = vector.shape_cast %77 : vector<8xf32> to vector<1x8xf32>
    %79 = vector.broadcast %72 : i32 to vector<1x8xi32>
    %80 = arith.cmpi eq, %1, %79 : vector<1x8xi32>
    %cst_25 = arith.constant 5.000000e+00 : f32
    %81 = vector.broadcast %cst_25 : f32 to vector<1x8xf32>
    %82 = arith.mulf %81, %78 : vector<1x8xf32>
    %cst_26 = arith.constant 0.000000e+00 : f32
    %83 = vector.broadcast %cst_26 : f32 to vector<1x8xf32>
    %84 = arith.select %80, %83, %82 : vector<1x8xi1>, vector<1x8xf32>
    %85 = arith.addf %71, %84 : vector<1x8xf32>
    %cst_27 = arith.constant 1.000000e+00 : f32
    %86 = vector.broadcast %cst_27 : f32 to vector<1x8xf32>
    %87 = arith.divf %86, %85 : vector<1x8xf32>
    %88 = arith.mulf %15, %87 : vector<1x8xf32>
    %cst_28 = arith.constant 1.000000e-10 : f32
    %89 = vector.broadcast %cst_28 : f32 to vector<1x8xf32>
    %90 = arith.addf %88, %89 : vector<1x8xf32>
    %91 = math.log %90 : vector<1x8xf32>
    %92 = arith.mulf %28, %87 : vector<1x8xf32>
    %cst_29 = arith.constant 1.000000e+00 : f32
    %93 = vector.broadcast %cst_29 : f32 to vector<1x8xf32>
    %94 = arith.subf %93, %92 : vector<1x8xf32>
    %cst_30 = arith.constant 1.000000e-10 : f32
    %95 = vector.broadcast %cst_30 : f32 to vector<1x8xf32>
    %96 = arith.addf %94, %95 : vector<1x8xf32>
    %97 = math.log %96 : vector<1x8xf32>
    %98 = arith.addf %91, %97 : vector<1x8xf32>
    %99 = arith.mulf %42, %87 : vector<1x8xf32>
    %cst_31 = arith.constant 1.000000e+00 : f32
    %100 = vector.broadcast %cst_31 : f32 to vector<1x8xf32>
    %101 = arith.subf %100, %99 : vector<1x8xf32>
    %cst_32 = arith.constant 1.000000e-10 : f32
    %102 = vector.broadcast %cst_32 : f32 to vector<1x8xf32>
    %103 = arith.addf %101, %102 : vector<1x8xf32>
    %104 = math.log %103 : vector<1x8xf32>
    %105 = arith.addf %98, %104 : vector<1x8xf32>
    %106 = arith.mulf %56, %87 : vector<1x8xf32>
    %cst_33 = arith.constant 1.000000e+00 : f32
    %107 = vector.broadcast %cst_33 : f32 to vector<1x8xf32>
    %108 = arith.subf %107, %106 : vector<1x8xf32>
    %cst_34 = arith.constant 1.000000e-10 : f32
    %109 = vector.broadcast %cst_34 : f32 to vector<1x8xf32>
    %110 = arith.addf %108, %109 : vector<1x8xf32>
    %111 = math.log %110 : vector<1x8xf32>
    %112 = arith.addf %105, %111 : vector<1x8xf32>
    %113 = arith.mulf %70, %87 : vector<1x8xf32>
    %cst_35 = arith.constant 1.000000e+00 : f32
    %114 = vector.broadcast %cst_35 : f32 to vector<1x8xf32>
    %115 = arith.subf %114, %113 : vector<1x8xf32>
    %cst_36 = arith.constant 1.000000e-10 : f32
    %116 = vector.broadcast %cst_36 : f32 to vector<1x8xf32>
    %117 = arith.addf %115, %116 : vector<1x8xf32>
    %118 = math.log %117 : vector<1x8xf32>
    %119 = arith.addf %112, %118 : vector<1x8xf32>
    %120 = arith.mulf %84, %87 : vector<1x8xf32>
    %cst_37 = arith.constant 1.000000e+00 : f32
    %121 = vector.broadcast %cst_37 : f32 to vector<1x8xf32>
    %122 = arith.subf %121, %120 : vector<1x8xf32>
    %cst_38 = arith.constant 1.000000e-10 : f32
    %123 = vector.broadcast %cst_38 : f32 to vector<1x8xf32>
    %124 = arith.addf %122, %123 : vector<1x8xf32>
    %125 = math.log %124 : vector<1x8xf32>
    %126 = arith.addf %119, %125 : vector<1x8xf32>
    %127 = vector.shape_cast %126 : vector<1x8xf32> to vector<1x1x8xf32>
    %cst_39 = arith.constant dense<0.000000e+00> : vector<1xf32>
    %128 = vector.multi_reduction <add>, %127, %cst_39 [1, 2] : vector<1x1x8xf32> to vector<1xf32>
    %129 = vector.shape_cast %128 : vector<1xf32> to vector<1x1x1xf32>
    %130 = vector.extract %129[0, 0, 0] : f32 from vector<1x1x1xf32>
    %131 = tpu.iota {dimensions = array<i32: 0>} : vector<8x128xi32>
    %132 = tpu.iota {dimensions = array<i32: 1>} : vector<8x128xi32>
    %c0_i32 = arith.constant 0 : i32
    %133 = vector.broadcast %c0_i32 : i32 to vector<8x128xi32>
    %134 = arith.cmpi eq, %131, %133 : vector<8x128xi32>
    %c0_i32_40 = arith.constant 0 : i32
    %135 = vector.broadcast %c0_i32_40 : i32 to vector<8x128xi32>
    %136 = arith.cmpi eq, %132, %135 : vector<8x128xi32>
    %137 = arith.andi %134, %136 : vector<8x128xi1>
    %cst_41 = arith.constant 0.000000e+00 : f32
    %138 = vector.broadcast %130 : f32 to vector<8x128xf32>
    %139 = vector.broadcast %cst_41 : f32 to vector<8x128xf32>
    %140 = arith.select %137, %138, %139 : vector<8x128xi1>, vector<8x128xf32>
    %c0_42 = arith.constant 0 : index
    %c0_43 = arith.constant 0 : index
    %141 = vector.load %arg4[%c0_42, %c0_43] : memref<8x128xf32, #tpu.memory_space<vmem>>, vector<8x128xf32>
    tpu.vector_store %arg4[%c0_42, %c0_43], %140 {strides = array<i32>} : memref<8x128xf32, #tpu.memory_space<vmem>>, vector<8x128xf32>,
    return
  }
  func.func @transform_0(%arg0: i32, %arg1: memref<5xi32, #tpu.memory_space<smem>>) -> (i32, i32) {
    %c0_i32 = arith.constant 0 : i32
    %c0_i32_0 = arith.constant 0 : i32
    return %c0_i32, %arg0 : i32, i32
  }
  func.func @transform_1(%arg0: i32, %arg1: memref<5xi32, #tpu.memory_space<smem>>) -> (i32, i32) {
    %c0_i32 = arith.constant 0 : i32
    %c0_i32_0 = arith.constant 0 : i32
    return %c0_i32, %arg0 : i32, i32
  }
  func.func @transform_2(%arg0: i32, %arg1: memref<5xi32, #tpu.memory_space<smem>>) -> (i32, i32) {
    %c0_i32 = arith.constant 0 : i32
    %c0_i32_0 = arith.constant 0 : i32
    return %arg0, %c0_i32 : i32, i32
  }
}

</mosaic_0001>

<llo_original>
// kernel: tpu_custom_call.1
$region0: #{tpu_custom_call.1}
  #allocation0 [shape = 'u32[]', space=smem, size = 0x4, offset = 0x4, fixed_abs, tag = 'smem constant byte address 0x4 - core index']
  #allocation1 [shape = 'u32[144,128]{1,0:T(1,128)}', space=vmem, size = 0x12000, scoped, tag = 'internal scratch']
  #allocation2 [shape = 's32[1]{0}', space=sflag, size = 0x4, scoped, tag = 'scoped memory for tpu_custom_call.1']
  #allocation3 [shape = 'u8[512]{0}', space=smem, size = 0x200, scoped, tag = 'prefetched SMEM operand 0']
  %s0 = inlined_call_operand.vmem [shape: s32[5], index: 0, kind: input, shape index: {}]
  %s1 = inlined_call_operand.vmem [shape: f32[10,8], index: 1, kind: input, shape index: {}]
  %s2 = inlined_call_operand.vmem [shape: s32[1,8], index: 2, kind: input, shape index: {}]
  %s3 = inlined_call_operand.hbm [shape: f32[8,128], index: 3, kind: output, shape index: {}]
  %s4 = sld [smem:[#allocation0]]
  $region18: #{tpu_custom_call.1} parent=0
    _
  %s6 = ssub.s32 1, %s4
  %s7 = scalar_select 0, %s6, %s4
  %s8 = sshll.u32 %s0, 4
  %s9 = int_to_ptr.vmem [resolvable:$true] %s8
  %11 = dma.vmem_to_smem %s9, 16, [#allocation3], [#allocation2]
  %12 = dma.done [#allocation2], 16
  %13 = sfence
  $region1: #{tpu_custom_call.1} parent=0
    #allocation4 [shape = 'u8[4096]{0}', space=vmem, size = 0x1000, scoped, tag = 'output window, operand 0, single buffered']
    #allocation5 [shape = 's32[1]{0}', space=sflag, size = 0x4, scoped, tag = 'scoped memory for tpu_custom_call.1']
    %14 = vsyncpa [#allocation5], 0
    // Predicated region
    $region2: #{tpu_custom_call.1} parent=1 // pred_check
      _
    $region3: #{tpu_custom_call.1} parent=1 // pred_check_branch
      %16 = sbr.rel (0) target = $region5
    $region4: #{tpu_custom_call.1} parent=1 // pred_region
      _
    $region5: #{tpu_custom_call.1} parent=1 // pred_fallthru
      _
    // Predicated region
    $region6: #{tpu_custom_call.1} parent=1 // pred_check
      _
    $region7: #{tpu_custom_call.1} parent=1 // pred_check_branch
      %18 = sbr.rel (0) target = $region9
    $region8: #{tpu_custom_call.1} parent=1 // pred_region
      _
    $region9: #{tpu_custom_call.1} parent=1 // pred_fallthru
      _
    %v19 = vld [vmem:[%s1] sm:$0xff]
    %v20 = vld [vmem:[%s1 + $0x8] sm:$0x3]
    %v21 = vld [vmem:[%s2] sm:$0x1]
    %vm22 = vcmask 64512
    %v23 = vsel %vm22, %v19, -inf
    %vm24 = vcmask 58368
    %v25 = vsel %vm24, %v20, -inf
    %v26 = vmax.f32 %v23, %v25
    %v27 = vrot.slane %v26, 4
    %v28 = vmax.f32 %v26, %v27
    %v29 = vrot.slane %v28, 2
    %v30 = vmax.f32 %v28, %v29
    %v31 = vrot.slane %v30, 1
    %v32 = vmax.f32 %v30, %v31
    %v33 = vsub.f32 %v19, %v32
    %v34 = vsub.f32 %v20, %v32
    %v35 = vmul.f32 %v33, 1.442695
    %v36 = vpow.pop %v35
    %v37 = vmul.f32 %v34, 1.442695
    %v38 = vpow.pop %v37
    %v39 = vlaneseq
    %v40 = vshrl.u32 %v39, 7
    %v41 = vadd.s32 %v40, 8
    %v42 = vlaneseq
    %v43 = vshrl.u32 %v42, 7
    %v44 = vsub.s32 0, %v43
    %v45 = vrot.slane %v21, %v44
    %vm46 = vcmp.eq.s32.totalorder %v40, %v45
    %vm47 = vcmp.eq.s32.totalorder %v41, %v45
    %v48 = vsel %vm46, %v36, 0.0
    %v49 = vsel %vm47, %v38, 0.0
    %v50 = vsel %vm22, %v48, 0.0
    %v51 = vsel %vm24, %v49, 0.0
    %v52 = vadd.f32 %v50, %v51
    %v53 = vrot.slane %v52, 4
    %v54 = vadd.f32 %v52, %v53
    %v55 = vrot.slane %v54, 2
    %v56 = vadd.f32 %v54, %v55
    %v57 = vrot.slane %v56, 1
    %v58 = vadd.f32 %v56, %v57
    %v59 = vmul.f32 %v58, 5.0
    %s60 = sld [smem:[#allocation3]]
    %v61 = vstv %s60
    %vm62 = vcmp.eq.s32.totalorder %v40, %v61
    %vm63 = vcmp.eq.s32.totalorder %v41, %v61
    %v64 = vsel %vm62, %v36, 0.0
    %v65 = vsel %vm63, %v38, 0.0
    %v66 = vsel %vm22, %v64, 0.0
    %v67 = vsel %vm24, %v65, 0.0
    %v68 = vadd.f32 %v66, %v67
    %v69 = vrot.slane %v68, 4
    %v70 = vadd.f32 %v68, %v69
    %v71 = vrot.slane %v70, 2
    %v72 = vadd.f32 %v70, %v71
    %v73 = vrot.slane %v72, 1
    %v74 = vadd.f32 %v72, %v73
    %vm75 = vcmp.eq.s32.totalorder %v21, %v61
    %v76 = vmul.f32 %v74, 5.0
    %v77 = vsel %vm75, 0.0, %v76
    %v78 = vadd.f32 %v59, %v77
    %s79 = sld [smem:[#allocation3 + $0x1]]
    %v80 = vstv %s79
    %vm81 = vcmp.eq.s32.totalorder %v40, %v80
    %vm82 = vcmp.eq.s32.totalorder %v41, %v80
    %v83 = vsel %vm81, %v36, 0.0
    %v84 = vsel %vm82, %v38, 0.0
    %v85 = vsel %vm22, %v83, 0.0
    %v86 = vsel %vm24, %v84, 0.0
    %v87 = vadd.f32 %v85, %v86
    %v88 = vrot.slane %v87, 4
    %v89 = vadd.f32 %v87, %v88
    %v90 = vrot.slane %v89, 2
    %v91 = vadd.f32 %v89, %v90
    %v92 = vrot.slane %v91, 1
    %v93 = vadd.f32 %v91, %v92
    %vm94 = vcmp.eq.s32.totalorder %v21, %v80
    %v95 = vmul.f32 %v93, 5.0
    %v96 = vsel %vm94, 0.0, %v95
    %v97 = vadd.f32 %v78, %v96
    %s98 = sld [smem:[#allocation3 + $0x2]]
    %v99 = vstv %s98
    %vm100 = vcmp.eq.s32.totalorder %v40, %v99
    %vm101 = vcmp.eq.s32.totalorder %v41, %v99
    %v102 = vsel %vm100, %v36, 0.0
    %v103 = vsel %vm101, %v38, 0.0
    %v104 = vsel %vm22, %v102, 0.0
    %v105 = vsel %vm24, %v103, 0.0
    %v106 = vadd.f32 %v104, %v105
    %v107 = vrot.slane %v106, 4
    %v108 = vadd.f32 %v106, %v107
    %v109 = vrot.slane %v108, 2
    %v110 = vadd.f32 %v108, %v109
    %v111 = vrot.slane %v110, 1
    %v112 = vadd.f32 %v110, %v111
    %vm113 = vcmp.eq.s32.totalorder %v21, %v99
    %v114 = vmul.f32 %v112, 5.0
    %v115 = vsel %vm113, 0.0, %v114
    %v116 = vadd.f32 %v97, %v115
    %s117 = sld [smem:[#allocation3 + $0x3]]
    %v118 = vstv %s117
    %vm119 = vcmp.eq.s32.totalorder %v40, %v118
    %vm120 = vcmp.eq.s32.totalorder %v41, %v118
    %v121 = vsel %vm119, %v36, 0.0
    %v122 = vsel %vm120, %v38, 0.0
    %v123 = vsel %vm22, %v121, 0.0
    %v124 = vsel %vm24, %v122, 0.0
    %v125 = vadd.f32 %v123, %v124
    %v126 = vrot.slane %v125, 4
    %v127 = vadd.f32 %v125, %v126
    %v128 = vrot.slane %v127, 2
    %v129 = vadd.f32 %v127, %v128
    %v130 = vrot.slane %v129, 1
    %v131 = vadd.f32 %v129, %v130
    %vm132 = vcmp.eq.s32.totalorder %v21, %v118
    %v133 = vmul.f32 %v131, 5.0
    %v134 = vsel %vm132, 0.0, %v133
    %v135 = vadd.f32 %v116, %v134
    %s136 = sld [smem:[#allocation3 + $0x4]]
    %v137 = vstv %s136
    %vm138 = vcmp.eq.s32.totalorder %v40, %v137
    %vm139 = vcmp.eq.s32.totalorder %v41, %v137
    %v140 = vsel %vm138, %v36, 0.0
    %v141 = vsel %vm139, %v38, 0.0
    %v142 = vsel %vm22, %v140, 0.0
    %v143 = vsel %vm24, %v141, 0.0
    %v144 = vadd.f32 %v142, %v143
    %v145 = vrot.slane %v144, 4
    %v146 = vadd.f32 %v144, %v145
    %v147 = vrot.slane %v146, 2
    %v148 = vadd.f32 %v146, %v147
    %v149 = vrot.slane %v148, 1
    %v150 = vadd.f32 %v148, %v149
    %vm151 = vcmp.eq.s32.totalorder %v21, %v137
    %v152 = vmul.f32 %v150, 5.0
    %v153 = vsel %vm151, 0.0, %v152
    %v154 = vadd.f32 %v135, %v153
    %v155 = vrcp.pop %v154
    %v156 = vmul.f32 1.0, %v155
    %v157 = vmul.f32 %v59, %v156
    %v158 = vadd.f32 %v157, 1e-10
    %v159 = vlog2.pop %v158
    %v160 = vmul.f32 %v159, 0.6931472
    %v161 = vmul.f32 %v77, %v156
    %v162 = vsub.f32 1.0, %v161
    %v163 = vadd.f32 %v162, 1e-10
    %v164 = vlog2.pop %v163
    %v165 = vmul.f32 %v164, 0.6931472
    %v166 = vadd.f32 %v160, %v165
    %v167 = vmul.f32 %v96, %v156
    %v168 = vsub.f32 1.0, %v167
    %v169 = vadd.f32 %v168, 1e-10
    %v170 = vlog2.pop %v169
    %v171 = vmul.f32 %v170, 0.6931472
    %v172 = vadd.f32 %v166, %v171
    %v173 = vmul.f32 %v115, %v156
    %v174 = vsub.f32 1.0, %v173
    %v175 = vadd.f32 %v174, 1e-10
    %v176 = vlog2.pop %v175
    %v177 = vmul.f32 %v176, 0.6931472
    %v178 = vadd.f32 %v172, %v177
    %v179 = vmul.f32 %v134, %v156
    %v180 = vsub.f32 1.0, %v179
    %v181 = vadd.f32 %v180, 1e-10
    %v182 = vlog2.pop %v181
    %v183 = vmul.f32 %v182, 0.6931472
    %v184 = vadd.f32 %v178, %v183
    %v185 = vmul.f32 %v153, %v156
    %v186 = vsub.f32 1.0, %v185
    %v187 = vadd.f32 %v186, 1e-10
    %v188 = vlog2.pop %v187
    %v189 = vmul.f32 %v188, 0.6931472
    %v190 = vadd.f32 %v184, %v189
    %vm191 = vcmask 57344
    %v192 = vsel %vm191, %v190, 0.0
    %193 = vadd.xlane.f32.xlu0 %v192
    %v194 = vpop.xlane.xlu0 %193
    %v195 = vrot.slane %v194, 4
    %v196 = vadd.f32 %v194, %v195
    %v197 = vrot.slane %v196, 2
    %v198 = vadd.f32 %v196, %v197
    %v199 = vrot.slane %v198, 1
    %v200 = vadd.f32 %v198, %v199
    %s201 = vtos %v200
    %v202 = vlaneseq
    %v203 = vand.u32 %v202, 127
    %vm204 = vcmp.eq.s32.totalorder %v40, 0
    %vm205 = vcmp.eq.s32.totalorder %v203, 0
    %vm206 = vmand %vm204, %vm205
    %v207 = vstv %s201
    %v208 = vsel %vm206, %v207, 0.0
    %209 = vst [vmem:[#allocation4] sm:$0xff] %v208
    // Predicated region
    $region10: #{tpu_custom_call.1} parent=1 // pred_check
      _
    $region11: #{tpu_custom_call.1} parent=1 // pred_check_branch
      %211 = sbr.rel (0) target = $region13
    $region12: #{tpu_custom_call.1} parent=1 // pred_region
      %s213 = ssub.s32 128, 128
      %214 = vsyncadd [#allocation5], %s213
      %s216 = sshll.u32 [#allocation4], 4
      %s217 = int_to_ptr.vmem [resolvable:$true] %s216
      %219 = dma.vmem_to_hbm [thread:$0]  %s217, 128, %s3, [#allocation5]
    $region13: #{tpu_custom_call.1} parent=1 // pred_fallthru
      _
    // Predicated region
    $region14: #{tpu_custom_call.1} parent=1 // pred_check
      _
    $region15: #{tpu_custom_call.1} parent=1 // pred_check_branch
      %221 = sbr.rel (0) target = $region17
    $region16: #{tpu_custom_call.1} parent=1 // pred_region
      %222 = dma.done [#allocation5], 128
    $region17: #{tpu_custom_call.1} parent=1 // pred_fallthru
      _
    %223 = vsyncpa [#allocation5], 1

</llo_original>
